<compile_context>
chip_gen: v6e
topology: v6e:2x2x1
jax: 0.10.0
libtpu: 0.0.40
codegen_flags: <defaults>
</compile_context>

<pallas_src>
import functools

import jax
import jax.numpy as jnp
from jax import lax
from jax.experimental import pallas as pl
from jax.experimental.pallas import tpu as pltpu


def _layernorm_kernel(x_ref, w_ref, b_ref, o_ref, *, eps: float,
                      inv_nc: float, nc_true: int, nc_pad: int):
    # x_ref: (blk, nc_pad)   w_ref / b_ref: (1, nc_pad) f32   o_ref: (blk, nc_pad)
    x = x_ref[...].astype(jnp.float32)

    # Pass 1: mean over the lane axis (padded lanes are zero, so the plain sum
    # is exact; scale by 1/true-count).
    s = jnp.sum(x, axis=-1, keepdims=True)
    mean = s * inv_nc

    # Pass 2: variance over the VMEM-resident tile (numerically safe; free
    # while HBM-bound). Padded lanes would contribute mean^2, so mask them.
    centered = x - mean
    if nc_pad != nc_true:
        lane = lax.broadcasted_iota(jnp.int32, x.shape, x.ndim - 1)
        centered_sq = jnp.where(lane < nc_true, centered * centered, 0.0)
    else:
        centered_sq = centered * centered
    var = jnp.maximum(jnp.sum(centered_sq, axis=-1, keepdims=True) * inv_nc, 0.0)

    inv = lax.rsqrt(var + eps)                           # EUP slot
    # w/b are f32, broadcast over the row axis; lane-dense unmasked store.
    o_ref[...] = (centered * inv * w_ref[...] + b_ref[...]).astype(o_ref.dtype)


def _round_up(v: int, m: int) -> int:
    return ((v + m - 1) // m) * m


def _vmem_config():
    """Generation-aware (tile_budget_bytes, vmem_limit_bytes)."""
    try:
        cap = pltpu.get_tpu_info().vmem_capacity_bytes
    except Exception:
        cap = 64 * 1024 * 1024                 # be conservative (v7x-sized)
    if cap >= 100 * 1024 * 1024:               # v5e / v6e: 128 MiB physical VMEM
        return 8 * 1024 * 1024, 64 * 1024 * 1024
    return 4 * 1024 * 1024, 32 * 1024 * 1024   # v7x: 64 MiB physical VMEM


def layernorm_2d(x, weight, bias, *, eps: float = 1e-5):
    """x: (b, t, n, c); weight, bias: (n, c). Returns (b, t, n, c)."""
    b, t, n, c = x.shape
    bt = b * t
    nc = n * c
    nc_pad = _round_up(nc, 128)                # keep the last dim lane-dense

    itemsize = jnp.dtype(x.dtype).itemsize
    row_align = {4: 8, 2: 16, 1: 32}.get(itemsize, 8)   # native sublane packing

    # Flatten the normalized (n, c) slab into one lane-dense last axis; pad
    # with zeros if n*c is not a multiple of 128 (zeros don't disturb the sum,
    # and the variance masks them explicitly).
    x2 = x.reshape(bt, nc)
    w2 = weight.reshape(1, nc).astype(jnp.float32)
    b2 = bias.reshape(1, nc).astype(jnp.float32)
    if nc_pad != nc:
        pad = nc_pad - nc
        x2 = jnp.pad(x2, ((0, 0), (0, pad)))
        w2 = jnp.pad(w2, ((0, 0), (0, pad)))
        b2 = jnp.pad(b2, ((0, 0), (0, pad)))

    # Row block: limited only by the VMEM tile budget (sized against the input
    # dtype) and rounded to the dtype's sublane packing.
    tile_budget, vmem_limit = _vmem_config()
    cap = max(row_align, (tile_budget // (nc_pad * itemsize)) // row_align * row_align)
    blk = min(_round_up(bt, row_align), cap)
    # Guarantee >= 2 grid steps when possible so v7x's second TensorCore gets
    # work (near-zero cost on v5e/v6e: one extra ~0.35 µs step).
    if pl.cdiv(bt, blk) < 2 and bt > row_align:
        blk = _round_up(pl.cdiv(bt, 2), row_align)
    grid = (pl.cdiv(bt, blk),)                 # ragged tail handled by Pallas

    cost = pl.CostEstimate(
        flops=8 * bt * nc_pad,
        transcendentals=bt,
        bytes_accessed=2 * bt * nc_pad * itemsize + 2 * nc_pad * 4,
    )

    out = pl.pallas_call(
        functools.partial(_layernorm_kernel, eps=eps, inv_nc=1.0 / nc,
                          nc_true=nc, nc_pad=nc_pad),
        out_shape=jax.ShapeDtypeStruct((bt, nc_pad), x.dtype),
        grid_spec=pltpu.PrefetchScalarGridSpec(
            num_scalar_prefetch=0,
            grid=grid,
            in_specs=[
                pl.BlockSpec((blk, nc_pad), lambda i: (i, 0)),
                pl.BlockSpec((1, nc_pad), lambda i: (0, 0)),   # resident weight
                pl.BlockSpec((1, nc_pad), lambda i: (0, 0)),   # resident bias
            ],
            out_specs=pl.BlockSpec((blk, nc_pad), lambda i: (i, 0)),
        ),
        compiler_params=pltpu.CompilerParams(
            dimension_semantics=("parallel",),
            vmem_limit_bytes=vmem_limit,
        ),
        cost_estimate=cost,
    )(x2, w2, b2)

    if nc_pad != nc:
        out = out[:, :nc]
    return out.reshape(b, t, n, c)


def _reference(x, weight, bias, eps=1e-5):
    b, t, n, c = x.shape
    x2 = x.reshape(b * t, n, c).astype(jnp.float32)
    mean = jnp.mean(x2, axis=(1, 2), keepdims=True)
    var = jnp.mean((x2 - mean) ** 2, axis=(1, 2), keepdims=True)
    y = (x2 - mean) / jnp.sqrt(var + eps)
    y = y * weight[None].astype(jnp.float32) + bias[None].astype(jnp.float32)
    return y.reshape(b, t, n, c).astype(x.dtype)


if __name__ == "__main__":
    # Shapes implied by the module: x = (b, t, n, c), n = channel, c = embed_dim.
    b, t, channel, embed_dim = 2, 8, 4, 32

    key = jax.random.PRNGKey(0)
    kx, kw, kb = jax.random.split(key, 3)
    x = jax.random.normal(kx, (b, t, channel, embed_dim), dtype=jnp.float32)
    # Deterministic (non-trivial) affine parameters, shape (channel, embed_dim).
    weight = 1.0 + 0.1 * jax.random.normal(kw, (channel, embed_dim), dtype=jnp.float32)
    bias = 0.1 * jax.random.normal(kb, (channel, embed_dim), dtype=jnp.float32)

    out = layernorm_2d(x, weight, bias)
    out = jax.block_until_ready(out)

    ref = _reference(x, weight, bias)
    assert out.shape == x.shape and out.dtype == x.dtype
    assert jnp.allclose(out, ref, atol=1e-5, rtol=1e-5)

    print("KERNEL_OK")
</pallas_src>

<mosaic_0001>
module attributes {stable_mosaic.version = 11 : i64} {
  func.func @_layernorm_kernel(%arg0: i32, %arg1: memref<8x128xf32, #tpu.memory_space<vmem>>, %arg2: memref<1x128xf32, #tpu.memory_space<vmem>>, %arg3: memref<1x128xf32, #tpu.memory_space<vmem>>, %arg4: memref<8x128xf32, #tpu.memory_space<vmem>>) attributes {dimension_semantics = [#tpu.dimension_semantics<parallel>], iteration_bounds = array<i64: 2>, scalar_prefetch = 0 : i64, scratch_operands = 0 : i64, tpu.core_type = #tpu.core_type<tc>, window_params = [{transform_indices = @transform_0, window_bounds = array<i64: 8, 128>}, {pipeline_mode = #tpu.pipeline_mode<synchronous>, transform_indices = @transform_1, window_bounds = array<i64: 1, 128>}, {pipeline_mode = #tpu.pipeline_mode<synchronous>, transform_indices = @transform_2, window_bounds = array<i64: 1, 128>}, {transform_indices = @transform_3, window_bounds = array<i64: 8, 128>}]} {
    %c0 = arith.constant 0 : index
    %c0_0 = arith.constant 0 : index
    %0 = vector.load %arg1[%c0, %c0_0] : memref<8x128xf32, #tpu.memory_space<vmem>>, vector<8x128xf32>
    %cst = arith.constant dense<0.000000e+00> : vector<8xf32>
    %1 = vector.multi_reduction <add>, %0, %cst [1] : vector<8x128xf32> to vector<8xf32>
    %2 = vector.shape_cast %1 : vector<8xf32> to vector<8x1xf32>
    %cst_1 = arith.constant 7.812500e-03 : f32
    %3 = vector.broadcast %cst_1 : f32 to vector<8x1xf32>
    %4 = arith.mulf %2, %3 : vector<8x1xf32>
    %5 = vector.broadcast %4 : vector<8x1xf32> to vector<8x128xf32>
    %6 = arith.subf %0, %5 : vector<8x128xf32>
    %7 = arith.mulf %6, %6 : vector<8x128xf32>
    %cst_2 = arith.constant dense<0.000000e+00> : vector<8xf32>
    %8 = vector.multi_reduction <add>, %7, %cst_2 [1] : vector<8x128xf32> to vector<8xf32>
    %9 = vector.shape_cast %8 : vector<8xf32> to vector<8x1xf32>
    %cst_3 = arith.constant 7.812500e-03 : f32
    %10 = vector.broadcast %cst_3 : f32 to vector<8x1xf32>
    %11 = arith.mulf %9, %10 : vector<8x1xf32>
    %cst_4 = arith.constant 0.000000e+00 : f32
    %12 = vector.broadcast %cst_4 : f32 to vector<8x1xf32>
    %13 = arith.maximumf %11, %12 : vector<8x1xf32>
    %cst_5 = arith.constant 9.99999974E-6 : f32
    %14 = vector.broadcast %cst_5 : f32 to vector<8x1xf32>
    %15 = arith.addf %13, %14 : vector<8x1xf32>
    %16 = math.rsqrt %15 : vector<8x1xf32>
    %17 = vector.broadcast %16 : vector<8x1xf32> to vector<8x128xf32>
    %18 = arith.mulf %6, %17 : vector<8x128xf32>
    %c0_6 = arith.constant 0 : index
    %c0_7 = arith.constant 0 : index
    %19 = vector.load %arg2[%c0_6, %c0_7] : memref<1x128xf32, #tpu.memory_space<vmem>>, vector<1x128xf32>
    %20 = vector.broadcast %19 : vector<1x128xf32> to vector<8x128xf32>
    %21 = arith.mulf %18, %20 : vector<8x128xf32>
    %c0_8 = arith.constant 0 : index
    %c0_9 = arith.constant 0 : index
    %22 = vector.load %arg3[%c0_8, %c0_9] : memref<1x128xf32, #tpu.memory_space<vmem>>, vector<1x128xf32>
    %23 = vector.broadcast %22 : vector<1x128xf32> to vector<8x128xf32>
    %24 = arith.addf %21, %23 : vector<8x128xf32>
    %c0_10 = arith.constant 0 : index
    %c0_11 = arith.constant 0 : index
    %25 = vector.load %arg4[%c0_10, %c0_11] : memref<8x128xf32, #tpu.memory_space<vmem>>, vector<8x128xf32>
    tpu.vector_store %arg4[%c0_10, %c0_11], %24 {strides = array<i32>} : memref<8x128xf32, #tpu.memory_space<vmem>>, vector<8x128xf32>,
    return
  }
  func.func @transform_0(%arg0: i32) -> (i32, i32) {
    %c0_i32 = arith.constant 0 : i32
    %c0_i32_0 = arith.constant 0 : i32
    return %arg0, %c0_i32 : i32, i32
  }
  func.func @transform_1(%arg0: i32) -> (i32, i32) {
    %c0_i32 = arith.constant 0 : i32
    %c0_i32_0 = arith.constant 0 : i32
    %c0_i32_1 = arith.constant 0 : i32
    return %c0_i32, %c0_i32_0 : i32, i32
  }
  func.func @transform_2(%arg0: i32) -> (i32, i32) {
    %c0_i32 = arith.constant 0 : i32
    %c0_i32_0 = arith.constant 0 : i32
    %c0_i32_1 = arith.constant 0 : i32
    return %c0_i32, %c0_i32_0 : i32, i32
  }
  func.func @transform_3(%arg0: i32) -> (i32, i32) {
    %c0_i32 = arith.constant 0 : i32
    %c0_i32_0 = arith.constant 0 : i32
    return %arg0, %c0_i32 : i32, i32
  }
}

</mosaic_0001>

<llo_original>
// kernel: tpu_custom_call.1
$region0: #{tpu_custom_call.1}
  #allocation0 [shape = 'u32[]', space=smem, size = 0x4, offset = 0x4, fixed_abs, tag = 'smem constant byte address 0x4 - core index']
  #allocation1 [shape = 'u32[144,128]{1,0:T(1,128)}', space=vmem, size = 0x12000, scoped, tag = 'internal scratch']
  %s0 = inlined_call_operand.hbm [shape: f32[16,128], index: 0, kind: input, shape index: {}]
  %s1 = inlined_call_operand.vmem [shape: f32[1,128], index: 1, kind: input, shape index: {}]
  %s2 = inlined_call_operand.vmem [shape: f32[1,128], index: 2, kind: input, shape index: {}]
  %s3 = inlined_call_operand.hbm [shape: f32[16,128], index: 3, kind: output, shape index: {}]
  %s4 = sld [smem:[#allocation0]]
  $region49: #{tpu_custom_call.1} parent=0
    _
  %s6 = ssub.s32 1, %s4
  %s7 = scalar_select 0, %s6, %s4
  $region1: #{tpu_custom_call.1} parent=0
    #allocation2 [shape = 'u8[8192]{0}', space=vmem, size = 0x2000, scoped, tag = 'input window, operand 0']
    #allocation3 [shape = 's32[2]{0}', space=sflag, size = 0x8, scoped, tag = 'scoped memory for tpu_custom_call.1']
    #allocation4 [shape = 's32[2]{0}', space=sflag, size = 0x8, scoped, tag = 'scoped memory for tpu_custom_call.1']
    #allocation5 [shape = 'u8[8192]{0}', space=vmem, size = 0x2000, scoped, tag = 'output window, operand 0']
    %8 = vsyncpa [#allocation3], 0
    %s9 = scalar_lea.sflag [#allocation3], 1
    %10 = vsyncpa %s9, 0
    %11 = vsyncpa [#allocation4], 0
    %s12 = scalar_lea.sflag [#allocation4], 1
    %13 = vsyncpa %s12, 0
    loop: start=0, step=1, limit=4
    $region2: #{tpu_custom_call.1} parent=1 // loop_pre_header
      _
    $region3: #{tpu_custom_call.1} parent=1 // loop_header
      %s15 = sphi 0, %s19
      %p16 = scmp.ge.s32.totalorder %s15, 4
      %s25 = sphi 0, %s27
      %s28 = sphi 0, %s25
      %s29 = sphi 0, %s28
      %s45 = sphi 0, %s29
      %s49 = sphi 0, %s49
      %s51 = sphi 0, %s49
      %s52 = sphi 0, %s51
      %s66 = sphi 0, %s52
      %s70 = sphi 0, %s70
      %s72 = sphi 0, %s70
      %s73 = sphi 0, %s72
      %s87 = sphi 0, %s73
      %s93 = sphi 0, %s95
      %s96 = sphi 0, %s93
      %s97 = sphi 0, %s96
      %s113 = sphi 0, %s97
    $region4: #{tpu_custom_call.1} parent=1 // loop_header_branch
      %18 = sbr.rel (%p16) target = $region8
    $region5: #{tpu_custom_call.1} parent=1 // loop_body
      %s20 = ssub.s32 %s15, 1
      %s21 = ssub.s32 %s15, 2
      %s22 = sadd.s32 %s15, 1
      %s23 = ssub.s32 %s15, %s22
      %p24 = scmp.eq.s32.totalorder %s23, 0
      %s26 = sadd.s32 %s25, 1
      %s27 = scalar_select %p24, %s25, %s26
      %p30 = pneg %p24
      %p31 = scmp.eq.s32.totalorder %s15, 1
      %p32 = por %p30, %p31
      %p33 = scmp.ne.s32.totalorder %s25, %s28
      %p34 = scmp.eq.s32.totalorder %s15, 0
      %p35 = por %p33, %p34
      %p36 = scmp.ne.s32.totalorder %s25, %s28
      %p37 = scmp.eq.s32.totalorder %s20, 1
      %p38 = por %p36, %p37
      %p39 = scmp.ne.s32.totalorder %s28, %s29
      %p40 = scmp.eq.s32.totalorder %s20, 0
      %p41 = por %p39, %p40
      %p42 = scmp.ne.s32.totalorder %s28, %s29
      %p43 = scmp.eq.s32.totalorder %s21, 1
      %p44 = por %p42, %p43
      %p46 = scmp.ne.s32.totalorder %s29, %s45
      %p47 = scmp.eq.s32.totalorder %s21, 0
      %p48 = por %p46, %p47
      %s50 = sadd.s32 %s49, 1
      %p53 = scmp.eq.s32.totalorder %s15, 1
      %p54 = scmp.ne.s32.totalorder %s49, %s51
      %p55 = scmp.eq.s32.totalorder %s15, 0
      %p56 = por %p54, %p55
      %p57 = scmp.ne.s32.totalorder %s49, %s51
      %p58 = scmp.eq.s32.totalorder %s20, 1
      %p59 = por %p57, %p58
      %p60 = scmp.ne.s32.totalorder %s51, %s52
      %p61 = scmp.eq.s32.totalorder %s20, 0
      %p62 = por %p60, %p61
      %p63 = scmp.ne.s32.totalorder %s51, %s52
      %p64 = scmp.eq.s32.totalorder %s21, 1
      %p65 = por %p63, %p64
      %p67 = scmp.ne.s32.totalorder %s52, %s66
      %p68 = scmp.eq.s32.totalorder %s21, 0
      %p69 = por %p67, %p68
      %s71 = sadd.s32 %s70, 1
      %p74 = scmp.eq.s32.totalorder %s15, 1
      %p75 = scmp.ne.s32.totalorder %s70, %s72
      %p76 = scmp.eq.s32.totalorder %s15, 0
      %p77 = por %p75, %p76
      %p78 = scmp.ne.s32.totalorder %s70, %s72
      %p79 = scmp.eq.s32.totalorder %s20, 1
      %p80 = por %p78, %p79
      %p81 = scmp.ne.s32.totalorder %s72, %s73
      %p82 = scmp.eq.s32.totalorder %s20, 0
      %p83 = por %p81, %p82
      %p84 = scmp.ne.s32.totalorder %s72, %s73
      %p85 = scmp.eq.s32.totalorder %s21, 1
      %p86 = por %p84, %p85
      %p88 = scmp.ne.s32.totalorder %s73, %s87
      %p89 = scmp.eq.s32.totalorder %s21, 0
      %p90 = por %p88, %p89
      %s91 = ssub.s32 %s15, %s22
      %p92 = scmp.eq.s32.totalorder %s91, 0
      %s94 = sadd.s32 %s93, 1
      %s95 = scalar_select %p92, %s93, %s94
      %p98 = pneg %p92
      %p99 = scmp.eq.s32.totalorder %s15, 1
      %p100 = por %p98, %p99
      %p101 = scmp.ne.s32.totalorder %s93, %s96
      %p102 = scmp.eq.s32.totalorder %s15, 0
      %p103 = por %p101, %p102
      %p104 = scmp.ne.s32.totalorder %s93, %s96
      %p105 = scmp.eq.s32.totalorder %s20, 1
      %p106 = por %p104, %p105
      %p107 = scmp.ne.s32.totalorder %s96, %s97
      %p108 = scmp.eq.s32.totalorder %s20, 0
      %p109 = por %p107, %p108
      %p110 = scmp.ne.s32.totalorder %s96, %s97
      %p111 = scmp.eq.s32.totalorder %s21, 1
      %p112 = por %p110, %p111
      %p114 = scmp.ne.s32.totalorder %s97, %s113
      %p115 = scmp.eq.s32.totalorder %s21, 0
      %p116 = por %p114, %p115
      %p117 = scmp.le.s32.totalorder 1, %s15
      %p118 = scmp.lt.s32.totalorder %s15, 3
      %p119 = pnand %p117, %p118
      %p120 = pneg %p119
      // Predicated region
      $region9: #{tpu_custom_call.1} parent=5 // pred_check
        _
      $region10: #{tpu_custom_call.1} parent=5 // pred_check_branch
        %122 = sbr.rel (%p119) target = $region12
      $region11: #{tpu_custom_call.1} parent=5 // pred_region
        %s123 = ssub.s32 %s15, 1
        // Predicated region
        $region13: #{tpu_custom_call.1} parent=11 // pred_check
          %p124 = pneg %p62
        $region14: #{tpu_custom_call.1} parent=11 // pred_check_branch
          %126 = sbr.rel (%p124) target = $region16
        $region15: #{tpu_custom_call.1} parent=11 // pred_region
          _
        $region16: #{tpu_custom_call.1} parent=11 // pred_fallthru
          _
        // Predicated region
        $region17: #{tpu_custom_call.1} parent=11 // pred_check
          %p127 = pneg %p83
        $region18: #{tpu_custom_call.1} parent=11 // pred_check_branch
          %129 = sbr.rel (%p127) target = $region20
        $region19: #{tpu_custom_call.1} parent=11 // pred_region
          _
        $region20: #{tpu_custom_call.1} parent=11 // pred_fallthru
          _
      $region12: #{tpu_custom_call.1} parent=5 // pred_fallthru
        _
      %p130 = scmp.lt.s32.totalorder %s15, 2
      // Predicated region
      $region21: #{tpu_custom_call.1} parent=5 // pred_check
        %p131 = pneg %p130
      $region22: #{tpu_custom_call.1} parent=5 // pred_check_branch
        %133 = sbr.rel (%p131) target = $region24
      $region23: #{tpu_custom_call.1} parent=5 // pred_region
        // Predicated region
        $region25: #{tpu_custom_call.1} parent=23 // pred_check
          %p134 = pneg %p35
        $region26: #{tpu_custom_call.1} parent=23 // pred_check_branch
          %136 = sbr.rel (%p134) target = $region28
        $region27: #{tpu_custom_call.1} parent=23 // pred_region
          %s137 = sand.u32 %s25, 1
          %s138 = scalar_lea.sflag [#allocation3], %s137
          %s139 = sand.u32 %s25, 1
          %s140 = smul.addr %s139, 8
          %s141 = scalar_lea.vmem [#allocation2], %s140
          %s143 = ssub.s32 128, 128
          %144 = vsyncadd %s138, %s143
          %s145 = smul.addr %s15, 128
          %s146 = scalar_lea.hbm %s0, %s145
          %s148 = sshll.u32 %s141, 4
          %s149 = int_to_ptr.vmem [resolvable:$true] %s148
          %151 = dma.hbm_to_vmem [thread:$0]  %s146, 128, %s149, %s138
        $region28: #{tpu_custom_call.1} parent=23 // pred_fallthru
          _
      $region24: #{tpu_custom_call.1} parent=5 // pred_fallthru
        _
      %p152 = scmp.le.s32.totalorder 1, %s15
      %p153 = scmp.lt.s32.totalorder %s15, 3
      %p154 = pnand %p152, %p153
      %p155 = pneg %p154
      // Predicated region
      $region29: #{tpu_custom_call.1} parent=5 // pred_check
        _
      $region30: #{tpu_custom_call.1} parent=5 // pred_check_branch
        %157 = sbr.rel (%p154) target = $region32
      $region31: #{tpu_custom_call.1} parent=5 // pred_region
        %s158 = ssub.s32 %s15, 1
        %s159 = sand.u32 %s28, 1
        %s160 = scalar_lea.sflag [#allocation3], %s159
        %s161 = sand.u32 %s28, 1
        %s162 = smul.addr %s161, 8
        %s163 = scalar_lea.vmem [#allocation2], %s162
        // Predicated region
        $region33: #{tpu_custom_call.1} parent=31 // pred_check
          %p164 = pneg %p41
        $region34: #{tpu_custom_call.1} parent=31 // pred_check_branch
          %166 = sbr.rel (%p164) target = $region36
        $region35: #{tpu_custom_call.1} parent=31 // pred_region
          %167 = dma.done %s160, 128
        $region36: #{tpu_custom_call.1} parent=31 // pred_fallthru
          _
        %s168 = sand.u32 %s28, 1
        %s169 = scalar_lea.sflag [#allocation3], %s168
        %s170 = sand.u32 %s28, 1
        %s171 = smul.addr %s170, 8
        %s172 = scalar_lea.vmem [#allocation2], %s171
        %p173 = pneg %p41
        %p174 = pneg %p38
        %p175 = pneg %p62
        %p176 = pneg %p59
        %p177 = pneg %p83
        %p178 = pneg %p80
        %p179 = pneg %p109
        %p180 = pneg %p106
        %s181 = sand.u32 %s96, 1
        %s182 = scalar_lea.sflag [#allocation4], %s181
        %s183 = sand.u32 %s96, 1
        %s184 = smul.addr %s183, 8
        %s185 = scalar_lea.vmem [#allocation5], %s184
        %v186 = vld [vmem:[%s163] sm:$0xff]
        %187 = vadd.xlane.f32.xlu0 %v186
        %v188 = vpop.xlane.xlu0 %187
        %v189 = vmul.f32 %v188, 0.0078125
        %v190 = vsub.f32 %v186, %v189
        %v191 = vmul.f32 %v190, %v190
        %192 = vadd.xlane.f32.xlu0 %v191
        %v193 = vpop.xlane.xlu0 %192
        %v194 = vmul.f32 %v193, 0.0078125
        %v195 = vmax.f32 %v194, 0.0
        %v196 = vadd.f32 %v195, 1e-05
        %v197 = vrsqrt.pop %v196
        %v198 = vmul.f32 %v190, %v197
        %v199 = vld [vmem:[%s1] sm:$0x1]
        %v201 = vlaneseq
        %v202 = vshrl.u32 %v201, 7
        %v203 = vsub.s32 0, %v202
        %v204 = vrot.slane %v199, %v203
        %v206 = vmul.f32 %v198, %v204
        %v207 = vld [vmem:[%s2] sm:$0x1]
        %v209 = vlaneseq
        %v210 = vshrl.u32 %v209, 7
        %v211 = vsub.s32 0, %v210
        %v212 = vrot.slane %v207, %v211
        %v214 = vadd.f32 %v206, %v212
        %215 = vst [vmem:[%s185] sm:$0xff] %v214
        %s216 = sand.u32 %s96, 1
        %s217 = scalar_lea.sflag [#allocation4], %s216
        %s218 = sand.u32 %s96, 1
        %s219 = smul.addr %s218, 8
        %s220 = scalar_lea.vmem [#allocation5], %s219
        // Predicated region
        $region37: #{tpu_custom_call.1} parent=31 // pred_check
          %p221 = pneg %p106
        $region38: #{tpu_custom_call.1} parent=31 // pred_check_branch
          %223 = sbr.rel (%p221) target = $region40
        $region39: #{tpu_custom_call.1} parent=31 // pred_region
          %s225 = ssub.s32 128, 128
          %226 = vsyncadd %s217, %s225
          %s227 = smul.addr %s20, 128
          %s228 = scalar_lea.hbm %s3, %s227
          %s230 = sshll.u32 %s220, 4
          %s231 = int_to_ptr.vmem [resolvable:$true] %s230
          %233 = dma.vmem_to_hbm [thread:$0]  %s231, 128, %s228, %s217
        $region40: #{tpu_custom_call.1} parent=31 // pred_fallthru
          _
      $region32: #{tpu_custom_call.1} parent=5 // pred_fallthru
        _
      %p234 = scmp.le.s32.totalorder 2, %s15
      // Predicated region
      $region41: #{tpu_custom_call.1} parent=5 // pred_check
        %p235 = pneg %p234
      $region42: #{tpu_custom_call.1} parent=5 // pred_check_branch
        %237 = sbr.rel (%p235) target = $region44
      $region43: #{tpu_custom_call.1} parent=5 // pred_region
        %s238 = ssub.s32 %s15, 2
        // Predicated region
        $region45: #{tpu_custom_call.1} parent=43 // pred_check
          %p239 = pneg %p112
        $region46: #{tpu_custom_call.1} parent=43 // pred_check_branch
          %241 = sbr.rel (%p239) target = $region48
        $region47: #{tpu_custom_call.1} parent=43 // pred_region
          %s242 = sand.u32 %s97, 1
          %s243 = scalar_lea.sflag [#allocation4], %s242
          %s244 = sand.u32 %s97, 1
          %s245 = smul.addr %s244, 8
          %s246 = scalar_lea.vmem [#allocation5], %s245
          %247 = dma.done %s243, 128
        $region48: #{tpu_custom_call.1} parent=43 // pred_fallthru
          _
      $region44: #{tpu_custom_call.1} parent=5 // pred_fallthru
        _
    $region6: #{tpu_custom_call.1} parent=1 // loop_footer
      %s19 = sadd.s32 1, %s15
    $region7: #{tpu_custom_call.1} parent=1 // loop_footer_branch
      %14 = sbr.rel target = $region3
    $region8: #{tpu_custom_call.1} parent=1 // loop_exit
      _
    %248 = vsyncpa [#allocation3], 1
    %s249 = scalar_lea.sflag [#allocation3], 1
    %250 = vsyncpa %s249, 1
    %251 = vsyncpa [#allocation4], 1
    %s252 = scalar_lea.sflag [#allocation4], 1
    %253 = vsyncpa %s252, 1

</llo_original>
